<compile_context>
chip_gen: v5e
topology: v5e:2x2
jax: 0.10.0
libtpu: 0.0.40
codegen_flags: <defaults>
</compile_context>

<pallas_src>
import math
import functools

import jax
import jax.numpy as jnp
from jax import lax
from jax.experimental import pallas as pl
from jax.experimental.pallas import tpu as pltpu


# ---------------------------------------------------------------------------
# Model configuration
# ---------------------------------------------------------------------------

IMAGE_SIZE = 16
PATCH_SIZE = 4
IN_CHANNELS = 4
D_MODEL = 32
NUM_CLASSES = 8
NUM_PATCHES = (IMAGE_SIZE // PATCH_SIZE) ** 2   # 16
SEQ_LEN = NUM_PATCHES + 1                        # 17 (cls token + patches)

LANES = 128      # vreg lane width: class dim padded to this for dense stores
SUBLANES = 8     # vreg sublane count: output rows rounded up to this

_VMEM = pl.BlockSpec(memory_space=pltpu.MemorySpace.VMEM)
_SMEM = pl.BlockSpec(memory_space=pltpu.MemorySpace.SMEM)


# ---------------------------------------------------------------------------
# Fused kernel: patch-proj -> (cls + PE) -> encoder LN -> head LN/MLP -> logits
# ---------------------------------------------------------------------------

def _vit_fused_kernel(patches_ref, wp_ref, bp_ref, cls_ref, pe_ref, scal_ref,
                      w1_ref, b1_ref, w2_ref, b2_ref, o_ref,
                      *, enc_eps, head_eps, d_model, rows_out):

    def torch_layernorm(x, alpha, bias, eps):
        # torch-style: mean / unbiased std (/(d-1)); scalar alpha/bias;
        # eps added to std (not variance).
        mean = jnp.mean(x, axis=-1, keepdims=True)
        var = jnp.sum((x - mean) ** 2, axis=-1, keepdims=True) / (d_model - 1)
        std = jnp.sqrt(var)
        return alpha * (x - mean) / (std + eps) + bias

    # Packed LayerNorm scalars: [enc_alpha, enc_bias, head_alpha, head_bias].
    enc_alpha = scal_ref[0]
    enc_bias = scal_ref[1]
    head_alpha = scal_ref[2]
    head_bias = scal_ref[3]

    # --- PatchEmbedding projection (stride==kernel Conv2d as one matmul) ----
    # With the encoder ModuleList empty, the patch tokens can never reach the
    # logits (the encoder LayerNorm is per-row and the head reads only row 0),
    # so everything downstream of this on rows 1..S-1 is dead; the projection
    # is kept so the kernel mirrors the module structure (compiler may DCE).
    _patch_tokens = (
        jnp.dot(patches_ref[...], wp_ref[...], preferred_element_type=jnp.float32)
        + bp_ref[...]
    )
    # TODO(synk): if encoder blocks are ever provided, route _patch_tokens
    # (+ pe[1:]) through them here and normalize all rows.

    # --- cls-token row: tokens[:, 0, :] = cls_token + pe[0] -----------------
    # (PositionalEncoding dropout is identity at inference; the cls row is
    # batch-independent, so it is broadcast to the padded output rows.)
    cls_row = cls_ref[...] + pe_ref[0:1, :]                       # (1, D)
    x0 = jnp.broadcast_to(cls_row, (rows_out, d_model))           # (rows, D)

    # --- Encoder (no layers) -> final LayerNorm, eps = 1e-6 -----------------
    xe = torch_layernorm(x0, enc_alpha, enc_bias, enc_eps)

    # --- MLPHead: LayerNorm(eps=d_model) -> Linear -> GELU -> Linear --------
    xn = torch_layernorm(xe, head_alpha, head_bias, head_eps)
    h = jnp.dot(xn, w1_ref[...], preferred_element_type=jnp.float32) + b1_ref[...]
    # exact GELU (erf), matching torch nn.GELU() default; EUP slot -> cheap.
    h = 0.5 * h * (1.0 + lax.erf(h * (1.0 / math.sqrt(2.0))))
    o_ref[...] = (
        jnp.dot(h, w2_ref[...], preferred_element_type=jnp.float32) + b2_ref[...]
    )


# ---------------------------------------------------------------------------
# Forward pass (single pallas_call, full-array VMEM blocks — shapes are tiny)
# ---------------------------------------------------------------------------

def _vit_forward_fn(x, kp):
    # x: [B, C, H, W]  (NCHW, like PyTorch)
    b, c, h, w = x.shape
    p = PATCH_SIZE
    nph, npw = h // p, w // p
    rows_out = max(SUBLANES, -(-b // SUBLANES) * SUBLANES)

    # Patch extraction: pure layout glue.  Flatten order (c, ph, pw) matches
    # Conv2d's weight layout, positions row-major over (h', w').
    patches = x.reshape(b, c, nph, p, npw, p).transpose(0, 2, 4, 1, 3, 5)
    patches = patches.reshape(b * nph * npw, c * p * p).astype(jnp.float32)

    kernel = functools.partial(
        _vit_fused_kernel,
        enc_eps=1e-6,
        head_eps=float(D_MODEL),   # LayerNorm(d_model): first positional = eps
        d_model=D_MODEL,
        rows_out=rows_out,
    )

    logits_pad = pl.pallas_call(
        kernel,
        out_shape=jax.ShapeDtypeStruct((rows_out, LANES), jnp.float32),
        in_specs=[_VMEM, _VMEM, _VMEM, _VMEM, _VMEM, _SMEM,
                  _VMEM, _VMEM, _VMEM, _VMEM],
        out_specs=_VMEM,
    )(patches, kp["w_patch"], kp["b_patch"], kp["cls"], kp["pe"],
      kp["ln_scalars"], kp["w1"], kp["b1"], kp["w2_pad"], kp["b2_pad"])

    return logits_pad[:b, :NUM_CLASSES]


vision_transformer_forward = jax.jit(_vit_forward_fn)


# ---------------------------------------------------------------------------
# Parameters
# ---------------------------------------------------------------------------

def make_positional_encoding(seq_len, d_model):
    position = jnp.arange(seq_len, dtype=jnp.float32)[:, None]
    div_term = jnp.exp(
        jnp.arange(0, d_model, 2, dtype=jnp.float32) * -(math.log(10000.0) / d_model)
    )
    pe = jnp.zeros((seq_len, d_model), dtype=jnp.float32)
    pe = pe.at[:, 0::2].set(jnp.sin(position * div_term))
    pe = pe.at[:, 1::2].set(jnp.cos(position * div_term))
    return pe                                     # (seq_len, d_model)


def init_params(key):
    keys = jax.random.split(key, 8)
    return {
        # Conv2d(in_channels, d_model, kernel=stride=patch)
        "conv_w": 0.02 * jax.random.normal(
            keys[0], (D_MODEL, IN_CHANNELS, PATCH_SIZE, PATCH_SIZE), jnp.float32),
        "conv_b": 0.01 * jax.random.normal(keys[1], (D_MODEL,), jnp.float32),
        # cls token ~ randn(1, 1, d_model)
        "cls_token": jax.random.normal(keys[2], (1, 1, D_MODEL), jnp.float32),
        # sinusoidal positional encoding buffer
        "pe": make_positional_encoding(SEQ_LEN, D_MODEL),
        # Encoder.norm = LayerNorm()  -> alpha=ones(1), bias=zeros(1)
        "enc_alpha": jnp.ones((1,), jnp.float32),
        "enc_bias": jnp.zeros((1,), jnp.float32),
        # MLPHead.norm = LayerNorm(d_model)  -> alpha=ones(1), bias=zeros(1)
        "head_alpha": jnp.ones((1,), jnp.float32),
        "head_bias": jnp.zeros((1,), jnp.float32),
        # MLP head linears
        "w1": 0.02 * jax.random.normal(keys[3], (D_MODEL, D_MODEL), jnp.float32),
        "b1": 0.01 * jax.random.normal(keys[4], (D_MODEL,), jnp.float32),
        "w2": 0.02 * jax.random.normal(keys[5], (D_MODEL, NUM_CLASSES), jnp.float32),
        "b2": 0.01 * jax.random.normal(keys[6], (NUM_CLASSES,), jnp.float32),
    }


def pack_kernel_params(params):
    """One-time repack of torch-layout params into kernel-friendly layouts."""
    k = IN_CHANNELS * PATCH_SIZE * PATCH_SIZE
    w2_pad = jnp.zeros((D_MODEL, LANES), jnp.float32).at[:, :NUM_CLASSES].set(
        params["w2"])
    b2_pad = jnp.zeros((1, LANES), jnp.float32).at[:, :NUM_CLASSES].set(
        params["b2"][None, :])
    return {
        "w_patch": params["conv_w"].reshape(D_MODEL, k).T,          # (K, D)
        "b_patch": params["conv_b"][None, :],                       # (1, D)
        "cls": params["cls_token"].reshape(1, D_MODEL),             # (1, D)
        "pe": params["pe"],                                         # (S, D)
        # packed SMEM scalars: [enc_alpha, enc_bias, head_alpha, head_bias]
        "ln_scalars": jnp.concatenate(
            [params["enc_alpha"], params["enc_bias"],
             params["head_alpha"], params["head_bias"]]),           # (4,)
        "w1": params["w1"],                                         # (D, D)
        "b1": params["b1"][None, :],                                # (1, D)
        "w2_pad": w2_pad,                                           # (D, 128)
        "b2_pad": b2_pad,                                           # (1, 128)
    }


# ---------------------------------------------------------------------------

if __name__ == "__main__":
    key = jax.random.PRNGKey(0)
    pkey, xkey = jax.random.split(key)
    params = init_params(pkey)
    kparams = pack_kernel_params(params)

    x = jax.random.normal(
        xkey, (2, IN_CHANNELS, IMAGE_SIZE, IMAGE_SIZE), jnp.float32)

    out = vision_transformer_forward(x, kparams)
    jax.block_until_ready(out)
    assert out.shape == (2, NUM_CLASSES), out.shape
    assert bool(jnp.all(jnp.isfinite(out)))
    print("KERNEL_OK")
</pallas_src>

<mosaic_0001>
module attributes {stable_mosaic.version = 11 : i64} {
  func.func @_vit_fused_kernel(%arg0: memref<32x64xf32, #tpu.memory_space<vmem>>, %arg1: memref<64x32xf32, #tpu.memory_space<vmem>>, %arg2: memref<1x32xf32, #tpu.memory_space<vmem>>, %arg3: memref<1x32xf32, #tpu.memory_space<vmem>>, %arg4: memref<17x32xf32, #tpu.memory_space<vmem>>, %arg5: memref<4xf32, #tpu.memory_space<smem>>, %arg6: memref<32x32xf32, #tpu.memory_space<vmem>>, %arg7: memref<1x32xf32, #tpu.memory_space<vmem>>, %arg8: memref<32x128xf32, #tpu.memory_space<vmem>>, %arg9: memref<1x128xf32, #tpu.memory_space<vmem>>, %arg10: memref<8x128xf32, #tpu.memory_space<vmem>>) attributes {dimension_semantics = [], scalar_prefetch = 0 : i64, scratch_operands = 0 : i64, tpu.core_type = #tpu.core_type<tc>} {
    %c0 = arith.constant 0 : index
    %0 = memref.load %arg5[%c0] : memref<4xf32, #tpu.memory_space<smem>>
    %c1 = arith.constant 1 : index
    %1 = memref.load %arg5[%c1] : memref<4xf32, #tpu.memory_space<smem>>
    %c2 = arith.constant 2 : index
    %2 = memref.load %arg5[%c2] : memref<4xf32, #tpu.memory_space<smem>>
    %c3 = arith.constant 3 : index
    %3 = memref.load %arg5[%c3] : memref<4xf32, #tpu.memory_space<smem>>
    %c0_0 = arith.constant 0 : index
    %c0_1 = arith.constant 0 : index
    %4 = vector.load %arg3[%c0_0, %c0_1] : memref<1x32xf32, #tpu.memory_space<vmem>>, vector<1x32xf32>
    %c0_2 = arith.constant 0 : index
    %c0_3 = arith.constant 0 : index
    %5 = vector.load %arg4[%c0_2, %c0_3] : memref<17x32xf32, #tpu.memory_space<vmem>>, vector<1x32xf32>
    %6 = arith.addf %4, %5 : vector<1x32xf32>
    %7 = vector.shape_cast %6 : vector<1x32xf32> to vector<1x32xf32>
    %8 = vector.broadcast %7 : vector<1x32xf32> to vector<8x32xf32>
    %cst = arith.constant dense<0.000000e+00> : vector<8xf32>
    %9 = vector.multi_reduction <add>, %8, %cst [1] : vector<8x32xf32> to vector<8xf32>
    %10 = vector.shape_cast %9 : vector<8xf32> to vector<8x1xf32>
    %cst_4 = arith.constant 3.200000e+01 : f32
    %11 = vector.broadcast %cst_4 : f32 to vector<8x1xf32>
    %12 = arith.divf %10, %11 : vector<8x1xf32>
    %13 = vector.broadcast %12 : vector<8x1xf32> to vector<8x32xf32>
    %14 = arith.subf %8, %13 : vector<8x32xf32>
    %15 = arith.mulf %14, %14 : vector<8x32xf32>
    %cst_5 = arith.constant dense<0.000000e+00> : vector<8xf32>
    %16 = vector.multi_reduction <add>, %15, %cst_5 [1] : vector<8x32xf32> to vector<8xf32>
    %17 = vector.shape_cast %16 : vector<8xf32> to vector<8x1xf32>
    %cst_6 = arith.constant 3.100000e+01 : f32
    %18 = vector.broadcast %cst_6 : f32 to vector<8x1xf32>
    %19 = arith.divf %17, %18 : vector<8x1xf32>
    %20 = math.sqrt %19 : vector<8x1xf32>
    %21 = vector.broadcast %12 : vector<8x1xf32> to vector<8x32xf32>
    %22 = arith.subf %8, %21 : vector<8x32xf32>
    %23 = vector.broadcast %0 : f32 to vector<8x32xf32>
    %24 = arith.mulf %23, %22 : vector<8x32xf32>
    %cst_7 = arith.constant 9.99999997E-7 : f32
    %25 = vector.broadcast %cst_7 : f32 to vector<8x1xf32>
    %26 = arith.addf %20, %25 : vector<8x1xf32>
    %27 = vector.broadcast %26 : vector<8x1xf32> to vector<8x32xf32>
    %28 = arith.divf %24, %27 : vector<8x32xf32>
    %29 = vector.broadcast %1 : f32 to vector<8x32xf32>
    %30 = arith.addf %28, %29 : vector<8x32xf32>
    %cst_8 = arith.constant dense<0.000000e+00> : vector<8xf32>
    %31 = vector.multi_reduction <add>, %30, %cst_8 [1] : vector<8x32xf32> to vector<8xf32>
    %32 = vector.shape_cast %31 : vector<8xf32> to vector<8x1xf32>
    %cst_9 = arith.constant 3.200000e+01 : f32
    %33 = vector.broadcast %cst_9 : f32 to vector<8x1xf32>
    %34 = arith.divf %32, %33 : vector<8x1xf32>
    %35 = vector.broadcast %34 : vector<8x1xf32> to vector<8x32xf32>
    %36 = arith.subf %30, %35 : vector<8x32xf32>
    %37 = arith.mulf %36, %36 : vector<8x32xf32>
    %cst_10 = arith.constant dense<0.000000e+00> : vector<8xf32>
    %38 = vector.multi_reduction <add>, %37, %cst_10 [1] : vector<8x32xf32> to vector<8xf32>
    %39 = vector.shape_cast %38 : vector<8xf32> to vector<8x1xf32>
    %cst_11 = arith.constant 3.100000e+01 : f32
    %40 = vector.broadcast %cst_11 : f32 to vector<8x1xf32>
    %41 = arith.divf %39, %40 : vector<8x1xf32>
    %42 = math.sqrt %41 : vector<8x1xf32>
    %43 = vector.broadcast %34 : vector<8x1xf32> to vector<8x32xf32>
    %44 = arith.subf %30, %43 : vector<8x32xf32>
    %45 = vector.broadcast %2 : f32 to vector<8x32xf32>
    %46 = arith.mulf %45, %44 : vector<8x32xf32>
    %cst_12 = arith.constant 3.200000e+01 : f32
    %47 = vector.broadcast %cst_12 : f32 to vector<8x1xf32>
    %48 = arith.addf %42, %47 : vector<8x1xf32>
    %49 = vector.broadcast %48 : vector<8x1xf32> to vector<8x32xf32>
    %50 = arith.divf %46, %49 : vector<8x32xf32>
    %51 = vector.broadcast %3 : f32 to vector<8x32xf32>
    %52 = arith.addf %50, %51 : vector<8x32xf32>
    %c0_13 = arith.constant 0 : index
    %c0_14 = arith.constant 0 : index
    %53 = vector.load %arg6[%c0_13, %c0_14] : memref<32x32xf32, #tpu.memory_space<vmem>>, vector<32x32xf32>
    %cst_15 = arith.constant dense<0.000000e+00> : vector<8x32xf32>
    %54 = tpu.matmul %52, %53, %cst_15 {dimension_numbers = #tpu.dot_dimension_numbers<[1], [0], [0], [1], [0, 0, 1, 1], [], []>} : vector<8x32xf32>, vector<32x32xf32>, vector<8x32xf32> -> vector<8x32xf32>
    %c0_16 = arith.constant 0 : index
    %c0_17 = arith.constant 0 : index
    %55 = vector.load %arg7[%c0_16, %c0_17] : memref<1x32xf32, #tpu.memory_space<vmem>>, vector<1x32xf32>
    %56 = vector.broadcast %55 : vector<1x32xf32> to vector<8x32xf32>
    %57 = arith.addf %54, %56 : vector<8x32xf32>
    %cst_18 = arith.constant 5.000000e-01 : f32
    %58 = vector.broadcast %cst_18 : f32 to vector<8x32xf32>
    %59 = arith.mulf %58, %57 : vector<8x32xf32>
    %cst_19 = arith.constant 0.707106769 : f32
    %60 = vector.broadcast %cst_19 : f32 to vector<8x32xf32>
    %61 = arith.mulf %57, %60 : vector<8x32xf32>
    %62 = math.erf %61 : vector<8x32xf32>
    %cst_20 = arith.constant 1.000000e+00 : f32
    %63 = vector.broadcast %cst_20 : f32 to vector<8x32xf32>
    %64 = arith.addf %63, %62 : vector<8x32xf32>
    %65 = arith.mulf %59, %64 : vector<8x32xf32>
    %c0_21 = arith.constant 0 : index
    %c0_22 = arith.constant 0 : index
    %66 = vector.load %arg8[%c0_21, %c0_22] : memref<32x128xf32, #tpu.memory_space<vmem>>, vector<32x128xf32>
    %cst_23 = arith.constant dense<0.000000e+00> : vector<8x128xf32>
    %67 = tpu.matmul %65, %66, %cst_23 {dimension_numbers = #tpu.dot_dimension_numbers<[1], [0], [0], [1], [0, 0, 1, 1], [], []>} : vector<8x32xf32>, vector<32x128xf32>, vector<8x128xf32> -> vector<8x128xf32>
    %c0_24 = arith.constant 0 : index
    %c0_25 = arith.constant 0 : index
    %68 = vector.load %arg9[%c0_24, %c0_25] : memref<1x128xf32, #tpu.memory_space<vmem>>, vector<1x128xf32>
    %69 = vector.broadcast %68 : vector<1x128xf32> to vector<8x128xf32>
    %70 = arith.addf %67, %69 : vector<8x128xf32>
    %c0_26 = arith.constant 0 : index
    %c0_27 = arith.constant 0 : index
    %71 = vector.load %arg10[%c0_26, %c0_27] : memref<8x128xf32, #tpu.memory_space<vmem>>, vector<8x128xf32>
    tpu.vector_store %arg10[%c0_26, %c0_27], %70 {strides = array<i32>} : memref<8x128xf32, #tpu.memory_space<vmem>>, vector<8x128xf32>,
    return
  }
}

</mosaic_0001>

<llo_original>
// kernel: _vit_forward_fn.1
$region0: #{_vit_forward_fn.1}
  #allocation0 [shape = 'u32[]', space=smem, size = 0x4, offset = 0x4, fixed_abs, tag = 'smem constant byte address 0x4 - core index']
  #allocation1 [shape = 'u32[72,128]{1,0:T(1,128)}', space=vmem, size = 0x9000, scoped, tag = 'internal scratch']
  %s0 = inlined_call_operand.vmem [shape: f32[32,64], index: 0, kind: input, shape index: {}]
  %s1 = inlined_call_operand.vmem [shape: f32[64,32], index: 1, kind: input, shape index: {}]
  %s2 = inlined_call_operand.vmem [shape: f32[1,32], index: 2, kind: input, shape index: {}]
  %s3 = inlined_call_operand.vmem [shape: f32[1,32], index: 3, kind: input, shape index: {}]
  %s4 = inlined_call_operand.vmem [shape: f32[17,32], index: 4, kind: input, shape index: {}]
  %s5 = inlined_call_operand.vmem [shape: f32[4], index: 5, kind: input, shape index: {}]
  %s6 = inlined_call_operand.vmem [shape: f32[32,32], index: 6, kind: input, shape index: {}]
  %s7 = inlined_call_operand.vmem [shape: f32[1,32], index: 7, kind: input, shape index: {}]
  %s8 = inlined_call_operand.vmem [shape: f32[32,128], index: 8, kind: input, shape index: {}]
  %s9 = inlined_call_operand.vmem [shape: f32[1,128], index: 9, kind: input, shape index: {}]
  %s10 = inlined_call_operand.vmem [shape: f32[8,128], index: 10, kind: output, shape index: {}]
  %s11 = sld [smem:[#allocation0]]
  $region54: #{_vit_forward_fn.1} parent=0
    _
  %s13 = ssub.s32 1, %s11
  %s14 = scalar_select 0, %s13, %s11
  $region1: #{_vit_forward_fn.1} parent=0
    #allocation2 [shape = 'u8[512]{0}', space=smem, size = 0x200, scoped, tag = 'input window, operand 5, single buffered']
    #allocation3 [shape = 's32[1]{0}', space=sflag, size = 0x4, scoped, tag = 'scoped memory for _vit_forward_fn.1']
    %15 = vsyncpa [#allocation3], 0
    // Predicated region
    $region2: #{_vit_forward_fn.1} parent=1 // pred_check
      _
    $region3: #{_vit_forward_fn.1} parent=1 // pred_check_branch
      %17 = sbr.rel (0) target = $region5
    $region4: #{_vit_forward_fn.1} parent=1 // pred_region
      _
    $region5: #{_vit_forward_fn.1} parent=1 // pred_fallthru
      _
    // Predicated region
    $region6: #{_vit_forward_fn.1} parent=1 // pred_check
      _
    $region7: #{_vit_forward_fn.1} parent=1 // pred_check_branch
      %19 = sbr.rel (0) target = $region9
    $region8: #{_vit_forward_fn.1} parent=1 // pred_region
      _
    $region9: #{_vit_forward_fn.1} parent=1 // pred_fallthru
      _
    // Predicated region
    $region10: #{_vit_forward_fn.1} parent=1 // pred_check
      _
    $region11: #{_vit_forward_fn.1} parent=1 // pred_check_branch
      %21 = sbr.rel (0) target = $region13
    $region12: #{_vit_forward_fn.1} parent=1 // pred_region
      _
    $region13: #{_vit_forward_fn.1} parent=1 // pred_fallthru
      _
    // Predicated region
    $region14: #{_vit_forward_fn.1} parent=1 // pred_check
      _
    $region15: #{_vit_forward_fn.1} parent=1 // pred_check_branch
      %23 = sbr.rel (0) target = $region17
    $region16: #{_vit_forward_fn.1} parent=1 // pred_region
      _
    $region17: #{_vit_forward_fn.1} parent=1 // pred_fallthru
      _
    // Predicated region
    $region18: #{_vit_forward_fn.1} parent=1 // pred_check
      _
    $region19: #{_vit_forward_fn.1} parent=1 // pred_check_branch
      %25 = sbr.rel (0) target = $region21
    $region20: #{_vit_forward_fn.1} parent=1 // pred_region
      _
    $region21: #{_vit_forward_fn.1} parent=1 // pred_fallthru
      _
    // Predicated region
    $region22: #{_vit_forward_fn.1} parent=1 // pred_check
      _
    $region23: #{_vit_forward_fn.1} parent=1 // pred_check_branch
      %27 = sbr.rel (0) target = $region25
    $region24: #{_vit_forward_fn.1} parent=1 // pred_region
      %29 = vsyncadd [#allocation3], 0
      %s31 = sshll.u32 %s5, 4
      %s32 = int_to_ptr.vmem [resolvable:$true] %s31
      %34 = dma.vmem_to_smem %s32, 16, [#allocation2], [#allocation3]
    $region25: #{_vit_forward_fn.1} parent=1 // pred_fallthru
      _
    // Predicated region
    $region26: #{_vit_forward_fn.1} parent=1 // pred_check
      _
    $region27: #{_vit_forward_fn.1} parent=1 // pred_check_branch
      %36 = sbr.rel (0) target = $region29
    $region28: #{_vit_forward_fn.1} parent=1 // pred_region
      _
    $region29: #{_vit_forward_fn.1} parent=1 // pred_fallthru
      _
    // Predicated region
    $region30: #{_vit_forward_fn.1} parent=1 // pred_check
      _
    $region31: #{_vit_forward_fn.1} parent=1 // pred_check_branch
      %38 = sbr.rel (0) target = $region33
    $region32: #{_vit_forward_fn.1} parent=1 // pred_region
      _
    $region33: #{_vit_forward_fn.1} parent=1 // pred_fallthru
      _
    // Predicated region
    $region34: #{_vit_forward_fn.1} parent=1 // pred_check
      _
    $region35: #{_vit_forward_fn.1} parent=1 // pred_check_branch
      %40 = sbr.rel (0) target = $region37
    $region36: #{_vit_forward_fn.1} parent=1 // pred_region
      _
    $region37: #{_vit_forward_fn.1} parent=1 // pred_fallthru
      _
    // Predicated region
    $region38: #{_vit_forward_fn.1} parent=1 // pred_check
      _
    $region39: #{_vit_forward_fn.1} parent=1 // pred_check_branch
      %42 = sbr.rel (0) target = $region41
    $region40: #{_vit_forward_fn.1} parent=1 // pred_region
      _
    $region41: #{_vit_forward_fn.1} parent=1 // pred_fallthru
      _
    // Predicated region
    $region42: #{_vit_forward_fn.1} parent=1 // pred_check
      _
    $region43: #{_vit_forward_fn.1} parent=1 // pred_check_branch
      %44 = sbr.rel (0) target = $region45
    $region44: #{_vit_forward_fn.1} parent=1 // pred_region
      %46 = dma.done [#allocation3], 16
    $region45: #{_vit_forward_fn.1} parent=1 // pred_fallthru
      _
    %47 = sfence
    %s48 = sld [smem:[#allocation2]]
    %s49 = sld [smem:[#allocation2 + $0x1]]
    %s50 = sld [smem:[#allocation2 + $0x2]]
    %s51 = sld [smem:[#allocation2 + $0x3]]
    %v52 = vld [vmem:[%s3] sm:$0x1]
    %v53 = vld [vmem:[%s4] sm:$0x1]
    %v54 = vadd.f32 %v52, %v53
    %v56 = vperm.slane %v54, 0
    %vm58 = vcmask 261120
    %v59 = vsel %vm58, %v56, 0.0
    %60 = vadd.xlane.f32.xlu0 %v59
    %v61 = vpop.xlane.xlu0 %60
    %v62 = vrcp.pop 32.0
    %v63 = vmul.f32 32.0, %v62
    %v64 = vsub.f32 1.0, %v63
    %v65 = vmul.f32 %v62, %v64
    %v66 = vadd.f32 %v62, %v65
    %vm67 = vweird.f32 %v62
    %v68 = vsel %vm67, %v62, %v66
    %v69 = vmul.f32 %v61, %v68
    %v70 = vsub.f32 %v56, %v69
    %v71 = vmul.f32 %v70, %v70
    %v72 = vsel %vm58, %v71, 0.0
    %73 = vadd.xlane.f32.xlu0 %v72
    %v74 = vpop.xlane.xlu0 %73
    %v75 = vrcp.pop 31.0
    %v76 = vmul.f32 31.0, %v75
    %v77 = vsub.f32 1.0, %v76
    %v78 = vmul.f32 %v75, %v77
    %v79 = vadd.f32 %v75, %v78
    %vm80 = vweird.f32 %v75
    %v81 = vsel %vm80, %v75, %v79
    %v82 = vmul.f32 %v74, %v81
    %v83 = vrsqrt.pop %v82
    %v84 = vmul.f32 %v83, %v82
    %v85 = vmul.f32 %v84, %v83
    %v86 = vmul.f32 0.5, %v85
    %v87 = vsub.f32 1.5, %v86
    %v88 = vmul.f32 %v83, %v87
    %v89 = vmul.f32 %v82, %v88
    %vm90 = vcmp.eq.f32.partialorder %v82, inf
    %v91 = vsel %vm90, %v82, %v89
    %vm92 = vcmp.eq.f32.partialorder %v82, 0.0
    %v93 = vand.u32 %v82, 2147483648
    %v94 = vsel %vm92, %v93, %v91
    %v95 = vstv %s48
    %v96 = vmul.f32 %v95, %v70
    %v97 = vadd.f32 %v94, 1e-06
    %v98 = vrcp.pop %v97
    %v99 = vmul.f32 %v97, %v98
    %v100 = vsub.f32 1.0, %v99
    %v101 = vmul.f32 %v98, %v100
    %v102 = vadd.f32 %v98, %v101
    %vm103 = vweird.f32 %v97
    %vm104 = vweird.f32 %v98
    %vm105 = vmor %vm103, %vm104
    %v106 = vsel %vm105, %v98, %v102
    %v107 = vand.u32 2147483647, %v97
    %vm108 = vcmp.eq.f32.partialorder %v107, 8.507059e+37
    %v109 = vand.u32 %v97, 2147483648
    %v110 = vor.u32 1.1754944e-38, %v109
    %v111 = vsel %vm108, %v110, %v106
    %v112 = vmul.f32 %v96, %v111
    %v113 = vstv %s49
    %v114 = vadd.f32 %v112, %v113
    %v115 = vsel %vm58, %v114, 0.0
    %116 = vadd.xlane.f32.xlu0 %v115
    %v117 = vpop.xlane.xlu0 %116
    %v118 = vmul.f32 %v117, %v68
    %v119 = vsub.f32 %v114, %v118
    %v120 = vmul.f32 %v119, %v119
    %v121 = vsel %vm58, %v120, 0.0
    %122 = vadd.xlane.f32.xlu0 %v121
    %v123 = vpop.xlane.xlu0 %122
    %v124 = vmul.f32 %v123, %v81
    %v125 = vrsqrt.pop %v124
    %v126 = vmul.f32 %v125, %v124
    %v127 = vmul.f32 %v126, %v125
    %v128 = vmul.f32 0.5, %v127
    %v129 = vsub.f32 1.5, %v128
    %v130 = vmul.f32 %v125, %v129
    %v131 = vmul.f32 %v124, %v130
    %vm132 = vcmp.eq.f32.partialorder %v124, inf
    %v133 = vsel %vm132, %v124, %v131
    %vm134 = vcmp.eq.f32.partialorder %v124, 0.0
    %v135 = vand.u32 %v124, 2147483648
    %v136 = vsel %vm134, %v135, %v133
    %v137 = vstv %s50
    %v138 = vmul.f32 %v137, %v119
    %v139 = vadd.f32 %v136, 32.0
    %v140 = vrcp.pop %v139
    %v141 = vmul.f32 %v139, %v140
    %v142 = vsub.f32 1.0, %v141
    %v143 = vmul.f32 %v140, %v142
    %v144 = vadd.f32 %v140, %v143
    %vm145 = vweird.f32 %v139
    %vm146 = vweird.f32 %v140
    %vm147 = vmor %vm145, %vm146
    %v148 = vsel %vm147, %v140, %v144
    %v149 = vand.u32 2147483647, %v139
    %vm150 = vcmp.eq.f32.partialorder %v149, 8.507059e+37
    %v151 = vand.u32 %v139, 2147483648
    %v152 = vor.u32 1.1754944e-38, %v151
    %v153 = vsel %vm150, %v152, %v148
    %v154 = vmul.f32 %v138, %v153
    %v155 = vstv %s51
    %v156 = vadd.f32 %v154, %v155
    %v157 = vld [vmem:[%s6] sm:$0xff]
    %v158 = vld [vmem:[%s6 + $0x8] sm:$0xff]
    %v159 = vld [vmem:[%s6 + $0x10] sm:$0xff]
    %v160 = vld [vmem:[%s6 + $0x18] sm:$0xff]
    %v161 = vld [vmem:[%s7] sm:$0x1]
    %v163 = vperm.slane %v161, 0
    %v166 = vsel %vm58, %v156, 0
    %168 = vmatpush.msra.mxu0 0.0
    %169 = vmatpush.msra.mxu0 0.0
    %170 = vmatpush.msra.mxu0 0.0
    %171 = vmatpush.msra.mxu0 0.0
    %172 = vmatpush.msra.mxu0 0.0
    %173 = vmatpush.msra.mxu0 0.0
    %174 = vmatpush.msra.mxu0 0.0
    %175 = vmatpush.msra.mxu0 0.0
    %176 = vmatpush.msra.mxu0 0.0
    %177 = vmatpush.msra.mxu0 0.0
    %178 = vmatpush.msra.mxu0 0.0
    %179 = vmatpush.msra.mxu0 0.0
    %180 = vmatpush.msra.mxu0 %v160
    %181 = vmatpush.msra.mxu0 %v159
    %182 = vmatpush.msra.mxu0 %v158
    %183 = vmatpush.msra.mxu0 %v157
    %184 = vmatmul.f32.gmra.mxu0 %v166
    %v185 = vpop.f32.mrf.mxu0
    %v186 = vadd.f32 %v163, %v185
    %187 = vdwg.mxu0
    %v188 = vmul.f32 %v186, 0.5
    %v189 = vmul.f32 %v186, 0.70710677
    %v190 = vmul.f32 %v189, %v189
    %v191 = vmin.f32 16.0, %v190
    %v192 = vmul.f32 %v191, 2.1237322e-06
    %v193 = vadd.f32 %v192, 0.00028619796
    %v194 = vmul.f32 %v191, %v193
    %v195 = vadd.f32 %v194, 0.0036580483
    %v196 = vmul.f32 %v191, %v195
    %v197 = vadd.f32 %v196, 0.05243302
    %v198 = vmul.f32 %v191, %v197
    %v199 = vadd.f32 %v198, 0.18741608
    %v200 = vmul.f32 %v191, %v199
    %v201 = vadd.f32 %v200, 1.1283791
    %v202 = vmul.f32 %v189, %v201
    %v203 = vmul.f32 %v191, 3.8918573e-05
    %v204 = vadd.f32 %v203, 0.001143296
    %v205 = vmul.f32 %v191, %v204
    %v206 = vadd.f32 %v205, 0.014752088
    %v207 = vmul.f32 %v191, %v206
    %v208 = vadd.f32 %v207, 0.112945676
    %v209 = vmul.f32 %v191, %v208
    %v210 = vadd.f32 %v209, 0.4994258
    %v211 = vmul.f32 %v191, %v210
    %v212 = vadd.f32 %v211, 1.0
    %v213 = vrcp.pop %v212
    %v214 = vmul.f32 %v212, %v213
    %v215 = vsub.f32 1.0, %v214
    %v216 = vmul.f32 %v213, %v215
    %v217 = vadd.f32 %v213, %v216
    %vm218 = vweird.f32 %v212
    %vm219 = vweird.f32 %v213
    %vm220 = vmor %vm218, %vm219
    %v221 = vsel %vm220, %v213, %v217
    %v222 = vand.u32 2147483647, %v212
    %vm223 = vcmp.eq.f32.partialorder %v222, 8.507059e+37
    %v224 = vand.u32 %v212, 2147483648
    %v225 = vor.u32 1.1754944e-38, %v224
    %v226 = vsel %vm223, %v225, %v221
    %v227 = vmul.f32 %v202, %v226
    %v228 = vmin.f32 %v227, 1.0
    %v229 = vmax.f32 %v228, -1.0
    %v230 = vadd.f32 %v229, 1.0
    %v231 = vmul.f32 %v188, %v230
    %v232 = vld [vmem:[%s8] sm:$0xff]
    %v233 = vld [vmem:[%s8 + $0x8] sm:$0xff]
    %v234 = vld [vmem:[%s8 + $0x10] sm:$0xff]
    %v235 = vld [vmem:[%s8 + $0x18] sm:$0xff]
    %v236 = vld [vmem:[%s9] sm:$0x1]
    %v238 = vperm.slane %v236, 0
    %v241 = vsel %vm58, %v231, 0
    %243 = vmatpush.msra.mxu0 0.0
    %244 = vmatpush.msra.mxu0 0.0
    %245 = vmatpush.msra.mxu0 0.0
    %246 = vmatpush.msra.mxu0 0.0
    %247 = vmatpush.msra.mxu0 0.0
    %248 = vmatpush.msra.mxu0 0.0
    %249 = vmatpush.msra.mxu0 0.0
    %250 = vmatpush.msra.mxu0 0.0
    %251 = vmatpush.msra.mxu0 0.0
    %252 = vmatpush.msra.mxu0 0.0
    %253 = vmatpush.msra.mxu0 0.0
    %254 = vmatpush.msra.mxu0 0.0
    %255 = vmatpush.msra.mxu0 %v235
    %256 = vmatpush.msra.mxu0 %v234
    %257 = vmatpush.msra.mxu0 %v233
    %258 = vmatpush.msra.mxu0 %v232
    %259 = vmatmul.f32.gmra.mxu0 %v241
    %v260 = vpop.f32.mrf.mxu0
    %v261 = vadd.f32 %v238, %v260
    %262 = vdwg.mxu0
    %263 = vst [vmem:[%s10] sm:$0xff] %v261
    // Predicated region
    $region46: #{_vit_forward_fn.1} parent=1 // pred_check
      _
    $region47: #{_vit_forward_fn.1} parent=1 // pred_check_branch
      %265 = sbr.rel (0) target = $region49
    $region48: #{_vit_forward_fn.1} parent=1 // pred_region
      _
    $region49: #{_vit_forward_fn.1} parent=1 // pred_fallthru
      _
    // Predicated region
    $region50: #{_vit_forward_fn.1} parent=1 // pred_check
      _
    $region51: #{_vit_forward_fn.1} parent=1 // pred_check_branch
      %267 = sbr.rel (0) target = $region53
    $region52: #{_vit_forward_fn.1} parent=1 // pred_region
      _
    $region53: #{_vit_forward_fn.1} parent=1 // pred_fallthru
      _
    %268 = vsyncpa [#allocation3], 1

</llo_original>
